<compile_context>
chip_gen: v7x
topology: tpu7x:2x2x1
jax: 0.10.0
libtpu: 0.0.40
codegen_flags: <defaults>
</compile_context>

<pallas_src>
import jax
import jax.numpy as jnp
from jax.experimental import pallas as pl
from jax.experimental.pallas import tpu as pltpu

KSIZE = 30              # conv kernel size / stride
OUT_CH = 32             # conv output channels
KFLAT = KSIZE * KSIZE   # 900


def _dct_matmul_kernel(p_ref, w_ref, o_ref):
    # p_ref: (tm, 900) patch tile, w_ref: (900, 32) full weight matrix
    o_ref[...] = jnp.dot(
        p_ref[...], w_ref[...], preferred_element_type=jnp.float32
    ).astype(o_ref.dtype)


def _round_up(v, m):
    return ((v + m - 1) // m) * m


def dct30x30_forward(x, weight, *, tm=1024):
    """Forward pass of DCT30x30 (Conv2d(1, 32, k=30, s=30, bias=False)).

    x:      (N, 1, H, W) float32, H % 30 == 0, W % 30 == 0
    weight: (32, 1, 30, 30) float32  (Conv2d weight, e.g. loaded DCT filters)
    returns (N, 32, H//30, W//30) float32
    """
    N, C, H, W = x.shape
    assert C == 1 and H % KSIZE == 0 and W % KSIZE == 0
    OH, OW = H // KSIZE, W // KSIZE
    M = N * OH * OW

    # im2col: non-overlapping 30x30 patches -> (M, 900) patch matrix.
    patches = (
        x.reshape(N, OH, KSIZE, OW, KSIZE)
        .transpose(0, 1, 3, 2, 4)
        .reshape(M, KFLAT)
    )
    # Conv weight (32, 1, 30, 30) -> matmul weight (900, 32)  (tiny, one-time)
    wmat = weight.reshape(OUT_CH, KFLAT).T

    # ---- row-tile selection -------------------------------------------------
    # Big tiles amortize the ~0.35 us per-grid-step overhead and keep the MXU fed;
    # keep >=2 grid steps when possible so v7x can shard the parallel axis over
    # both TensorCores. Non-final tiles must be a multiple of 8 (sublane).
    tm_eff = min(tm, M)
    if M > tm_eff:
        tm_eff = max(8, (tm_eff // 8) * 8)
    elif M >= 16:
        tm_eff = max(8, _round_up((M + 1) // 2, 8))
    grid_m = pl.cdiv(M, tm_eff)
    m_padded = grid_m * tm_eff          # output allocation only; no input copy

    # ---- compiler params ----------------------------------------------------
    lanes = _round_up(KFLAT, 128)                       # 900 -> 1024 lane pad
    vmem_needed = 2 * (tm_eff * lanes * 4               # double-buffered input
                       + _round_up(KFLAT, 8) * 128 * 4  # weight block
                       + tm_eff * 128 * 4)              # output block
    cp_kwargs = dict(dimension_semantics=("parallel",))
    if vmem_needed > 16 * 1024 * 1024:                  # v5e scoped-VMEM default
        cp_kwargs["vmem_limit_bytes"] = min(vmem_needed + (4 << 20), 64 << 20)

    out = pl.pallas_call(
        _dct_matmul_kernel,
        out_shape=jax.ShapeDtypeStruct((m_padded, OUT_CH), jnp.float32),
        grid_spec=pltpu.PrefetchScalarGridSpec(
            num_scalar_prefetch=0,
            grid=(grid_m,),
            in_specs=[
                pl.BlockSpec((tm_eff, KFLAT), lambda i: (i, 0)),
                pl.BlockSpec((KFLAT, OUT_CH), lambda i: (0, 0)),
            ],
            out_specs=pl.BlockSpec((tm_eff, OUT_CH), lambda i: (i, 0)),
        ),
        compiler_params=pltpu.CompilerParams(**cp_kwargs),
        cost_estimate=pl.CostEstimate(
            flops=2 * M * KFLAT * OUT_CH,
            transcendentals=0,
            bytes_accessed=(M * KFLAT + KFLAT * OUT_CH + M * OUT_CH) * 4,
        ),
    )(patches, wmat)

    out = out[:M].reshape(N, OH, OW, OUT_CH).transpose(0, 3, 1, 2)
    return out


if __name__ == "__main__":
    key = jax.random.PRNGKey(0)
    kx, kw = jax.random.split(key)

    # Small shapes consistent with the module: N=2, C=1, H=W=60 -> output (2, 32, 2, 2)
    x = jax.random.normal(kx, (2, 1, 60, 60), dtype=jnp.float32)
    # Deterministic synthetic weights (same shape as the np.load'ed DCT filters: (32, 1, 30, 30))
    weight = jax.random.normal(kw, (OUT_CH, 1, KSIZE, KSIZE), dtype=jnp.float32) * 0.02

    out = jax.jit(dct30x30_forward)(x, weight)
    out = jax.block_until_ready(out)

    # Reference check against XLA's conv (same semantics as torch Conv2d NCHW).
    ref = jax.lax.conv_general_dilated(
        x, weight,
        window_strides=(KSIZE, KSIZE),
        padding="VALID",
        dimension_numbers=("NCHW", "OIHW", "NCHW"),
    )
    assert out.shape == (2, OUT_CH, 2, 2), out.shape
    assert jnp.allclose(out, ref, atol=1e-4, rtol=1e-4)

    print("KERNEL_OK")
</pallas_src>

<mosaic_0001>
module attributes {stable_mosaic.version = 11 : i64} {
  func.func @_dct_matmul_kernel(%arg0: i32, %arg1: memref<8x900xf32, #tpu.memory_space<vmem>>, %arg2: memref<900x32xf32, #tpu.memory_space<vmem>>, %arg3: memref<8x32xf32, #tpu.memory_space<vmem>>) attributes {dimension_semantics = [#tpu.dimension_semantics<parallel>], iteration_bounds = array<i64: 1>, scalar_prefetch = 0 : i64, scratch_operands = 0 : i64, tpu.core_type = #tpu.core_type<tc>, window_params = [{transform_indices = @transform_0, window_bounds = array<i64: 8, 900>}, {pipeline_mode = #tpu.pipeline_mode<synchronous>, transform_indices = @transform_1, window_bounds = array<i64: 900, 32>}, {transform_indices = @transform_2, window_bounds = array<i64: 8, 32>}]} {
    %c0 = arith.constant 0 : index
    %c0_0 = arith.constant 0 : index
    %0 = vector.load %arg1[%c0, %c0_0] : memref<8x900xf32, #tpu.memory_space<vmem>>, vector<8x900xf32>
    %c0_1 = arith.constant 0 : index
    %c0_2 = arith.constant 0 : index
    %1 = vector.load %arg2[%c0_1, %c0_2] : memref<900x32xf32, #tpu.memory_space<vmem>>, vector<900x32xf32>
    %cst = arith.constant dense<0.000000e+00> : vector<8x32xf32>
    %2 = tpu.matmul %0, %1, %cst {dimension_numbers = #tpu.dot_dimension_numbers<[1], [0], [0], [1], [0, 0, 1, 1], [], []>} : vector<8x900xf32>, vector<900x32xf32>, vector<8x32xf32> -> vector<8x32xf32>
    %c0_3 = arith.constant 0 : index
    %c0_4 = arith.constant 0 : index
    %3 = vector.load %arg3[%c0_3, %c0_4] : memref<8x32xf32, #tpu.memory_space<vmem>>, vector<8x32xf32>
    tpu.vector_store %arg3[%c0_3, %c0_4], %2 {strides = array<i32>} : memref<8x32xf32, #tpu.memory_space<vmem>>, vector<8x32xf32>,
    return
  }
  func.func @transform_0(%arg0: i32) -> (i32, i32) {
    %c0_i32 = arith.constant 0 : i32
    %c0_i32_0 = arith.constant 0 : i32
    return %arg0, %c0_i32 : i32, i32
  }
  func.func @transform_1(%arg0: i32) -> (i32, i32) {
    %c0_i32 = arith.constant 0 : i32
    %c0_i32_0 = arith.constant 0 : i32
    %c0_i32_1 = arith.constant 0 : i32
    return %c0_i32, %c0_i32_0 : i32, i32
  }
  func.func @transform_2(%arg0: i32) -> (i32, i32) {
    %c0_i32 = arith.constant 0 : i32
    %c0_i32_0 = arith.constant 0 : i32
    return %arg0, %c0_i32 : i32, i32
  }
}

</mosaic_0001>

<llo_original>
// kernel: dct30x30_forward.1
$region0: #{dct30x30_forward.1}
  #allocation0 [shape = 'u32[]', space=smem, size = 0x4, offset = 0x4, fixed_abs, tag = 'smem constant byte address 0x4 - core index']
  #allocation1 [shape = 'u32[144,128]{1,0:T(1,128)}', space=vmem, size = 0x12000, scoped, tag = 'internal scratch']
  %s0 = inlined_call_operand.vmem [shape: f32[8,900], index: 0, kind: input, shape index: {}]
  %s1 = inlined_call_operand.vmem [shape: f32[900,32], index: 1, kind: input, shape index: {}]
  %s2 = inlined_call_operand.hbm [shape: f32[8,32], index: 2, kind: output, shape index: {}]
  %s3 = sld [smem:[#allocation0]]
  $region18: #{dct30x30_forward.1} parent=0
    _
  %s5 = ssub.s32 1, %s3
  %s6 = scalar_select 0, %s5, %s3
  $region1: #{dct30x30_forward.1} parent=0
    #allocation2 [shape = 'u8[4096]{0}', space=vmem, size = 0x1000, scoped, tag = 'output window, operand 0, single buffered']
    #allocation3 [shape = 's32[1]{0}', space=sflag, size = 0x4, scoped, tag = 'scoped memory for dct30x30_forward.1']
    %7 = vsyncpa [#allocation3], 0
    // Predicated region
    $region2: #{dct30x30_forward.1} parent=1 // pred_check
      _
    $region3: #{dct30x30_forward.1} parent=1 // pred_check_branch
      %9 = sbr.rel (0) target = $region5
    $region4: #{dct30x30_forward.1} parent=1 // pred_region
      _
    $region5: #{dct30x30_forward.1} parent=1 // pred_fallthru
      _
    // Predicated region
    $region6: #{dct30x30_forward.1} parent=1 // pred_check
      _
    $region7: #{dct30x30_forward.1} parent=1 // pred_check_branch
      %11 = sbr.rel (0) target = $region9
    $region8: #{dct30x30_forward.1} parent=1 // pred_region
      _
    $region9: #{dct30x30_forward.1} parent=1 // pred_fallthru
      _
    %v12 = vld [vmem:[%s0] sm:$0xff]
    %v13 = vld [vmem:[%s0 + $0x8] sm:$0xff]
    %v14 = vld [vmem:[%s0 + $0x10] sm:$0xff]
    %v15 = vld [vmem:[%s0 + $0x18] sm:$0xff]
    %v16 = vld [vmem:[%s0 + $0x20] sm:$0xff]
    %v17 = vld [vmem:[%s0 + $0x28] sm:$0xff]
    %v18 = vld [vmem:[%s0 + $0x30] sm:$0xff]
    %v19 = vld [vmem:[%s0 + $0x38] sm:$0xff]
    %v20 = vld [vmem:[%s1] sm:$0xff]
    %v21 = vld [vmem:[%s1 + $0x8] sm:$0xff]
    %v22 = vld [vmem:[%s1 + $0x10] sm:$0xff]
    %v23 = vld [vmem:[%s1 + $0x18] sm:$0xff]
    %v24 = vld [vmem:[%s1 + $0x20] sm:$0xff]
    %v25 = vld [vmem:[%s1 + $0x28] sm:$0xff]
    %v26 = vld [vmem:[%s1 + $0x30] sm:$0xff]
    %v27 = vld [vmem:[%s1 + $0x38] sm:$0xff]
    %v28 = vld [vmem:[%s1 + $0x40] sm:$0xff]
    %v29 = vld [vmem:[%s1 + $0x48] sm:$0xff]
    %v30 = vld [vmem:[%s1 + $0x50] sm:$0xff]
    %v31 = vld [vmem:[%s1 + $0x58] sm:$0xff]
    %v32 = vld [vmem:[%s1 + $0x60] sm:$0xff]
    %v33 = vld [vmem:[%s1 + $0x68] sm:$0xff]
    %v34 = vld [vmem:[%s1 + $0x70] sm:$0xff]
    %v35 = vld [vmem:[%s1 + $0x78] sm:$0xff]
    %v36 = vld [vmem:[%s1 + $0x80] sm:$0xff]
    %v37 = vld [vmem:[%s1 + $0x88] sm:$0xff]
    %v38 = vld [vmem:[%s1 + $0x90] sm:$0xff]
    %v39 = vld [vmem:[%s1 + $0x98] sm:$0xff]
    %v40 = vld [vmem:[%s1 + $0xa0] sm:$0xff]
    %v41 = vld [vmem:[%s1 + $0xa8] sm:$0xff]
    %v42 = vld [vmem:[%s1 + $0xb0] sm:$0xff]
    %v43 = vld [vmem:[%s1 + $0xb8] sm:$0xff]
    %v44 = vld [vmem:[%s1 + $0xc0] sm:$0xff]
    %v45 = vld [vmem:[%s1 + $0xc8] sm:$0xff]
    %v46 = vld [vmem:[%s1 + $0xd0] sm:$0xff]
    %v47 = vld [vmem:[%s1 + $0xd8] sm:$0xff]
    %v48 = vld [vmem:[%s1 + $0xe0] sm:$0xff]
    %v49 = vld [vmem:[%s1 + $0xe8] sm:$0xff]
    %v50 = vld [vmem:[%s1 + $0xf0] sm:$0xff]
    %v51 = vld [vmem:[%s1 + $0xf8] sm:$0xff]
    %v52 = vld [vmem:[%s1 + $0x100] sm:$0xff]
    %v53 = vld [vmem:[%s1 + $0x108] sm:$0xff]
    %v54 = vld [vmem:[%s1 + $0x110] sm:$0xff]
    %v55 = vld [vmem:[%s1 + $0x118] sm:$0xff]
    %v56 = vld [vmem:[%s1 + $0x120] sm:$0xff]
    %v57 = vld [vmem:[%s1 + $0x128] sm:$0xff]
    %v58 = vld [vmem:[%s1 + $0x130] sm:$0xff]
    %v59 = vld [vmem:[%s1 + $0x138] sm:$0xff]
    %v60 = vld [vmem:[%s1 + $0x140] sm:$0xff]
    %v61 = vld [vmem:[%s1 + $0x148] sm:$0xff]
    %v62 = vld [vmem:[%s1 + $0x150] sm:$0xff]
    %v63 = vld [vmem:[%s1 + $0x158] sm:$0xff]
    %v64 = vld [vmem:[%s1 + $0x160] sm:$0xff]
    %v65 = vld [vmem:[%s1 + $0x168] sm:$0xff]
    %v66 = vld [vmem:[%s1 + $0x170] sm:$0xff]
    %v67 = vld [vmem:[%s1 + $0x178] sm:$0xff]
    %v68 = vld [vmem:[%s1 + $0x180] sm:$0xff]
    %v69 = vld [vmem:[%s1 + $0x188] sm:$0xff]
    %v70 = vld [vmem:[%s1 + $0x190] sm:$0xff]
    %v71 = vld [vmem:[%s1 + $0x198] sm:$0xff]
    %v72 = vld [vmem:[%s1 + $0x1a0] sm:$0xff]
    %v73 = vld [vmem:[%s1 + $0x1a8] sm:$0xff]
    %v74 = vld [vmem:[%s1 + $0x1b0] sm:$0xff]
    %v75 = vld [vmem:[%s1 + $0x1b8] sm:$0xff]
    %v76 = vld [vmem:[%s1 + $0x1c0] sm:$0xff]
    %v77 = vld [vmem:[%s1 + $0x1c8] sm:$0xff]
    %v78 = vld [vmem:[%s1 + $0x1d0] sm:$0xff]
    %v79 = vld [vmem:[%s1 + $0x1d8] sm:$0xff]
    %v80 = vld [vmem:[%s1 + $0x1e0] sm:$0xff]
    %v81 = vld [vmem:[%s1 + $0x1e8] sm:$0xff]
    %v82 = vld [vmem:[%s1 + $0x1f0] sm:$0xff]
    %v83 = vld [vmem:[%s1 + $0x1f8] sm:$0xff]
    %v84 = vld [vmem:[%s1 + $0x200] sm:$0xff]
    %v85 = vld [vmem:[%s1 + $0x208] sm:$0xff]
    %v86 = vld [vmem:[%s1 + $0x210] sm:$0xff]
    %v87 = vld [vmem:[%s1 + $0x218] sm:$0xff]
    %v88 = vld [vmem:[%s1 + $0x220] sm:$0xff]
    %v89 = vld [vmem:[%s1 + $0x228] sm:$0xff]
    %v90 = vld [vmem:[%s1 + $0x230] sm:$0xff]
    %v91 = vld [vmem:[%s1 + $0x238] sm:$0xff]
    %v92 = vld [vmem:[%s1 + $0x240] sm:$0xff]
    %v93 = vld [vmem:[%s1 + $0x248] sm:$0xff]
    %v94 = vld [vmem:[%s1 + $0x250] sm:$0xff]
    %v95 = vld [vmem:[%s1 + $0x258] sm:$0xff]
    %v96 = vld [vmem:[%s1 + $0x260] sm:$0xff]
    %v97 = vld [vmem:[%s1 + $0x268] sm:$0xff]
    %v98 = vld [vmem:[%s1 + $0x270] sm:$0xff]
    %v99 = vld [vmem:[%s1 + $0x278] sm:$0xff]
    %v100 = vld [vmem:[%s1 + $0x280] sm:$0xff]
    %v101 = vld [vmem:[%s1 + $0x288] sm:$0xff]
    %v102 = vld [vmem:[%s1 + $0x290] sm:$0xff]
    %v103 = vld [vmem:[%s1 + $0x298] sm:$0xff]
    %v104 = vld [vmem:[%s1 + $0x2a0] sm:$0xff]
    %v105 = vld [vmem:[%s1 + $0x2a8] sm:$0xff]
    %v106 = vld [vmem:[%s1 + $0x2b0] sm:$0xff]
    %v107 = vld [vmem:[%s1 + $0x2b8] sm:$0xff]
    %v108 = vld [vmem:[%s1 + $0x2c0] sm:$0xff]
    %v109 = vld [vmem:[%s1 + $0x2c8] sm:$0xff]
    %v110 = vld [vmem:[%s1 + $0x2d0] sm:$0xff]
    %v111 = vld [vmem:[%s1 + $0x2d8] sm:$0xff]
    %v112 = vld [vmem:[%s1 + $0x2e0] sm:$0xff]
    %v113 = vld [vmem:[%s1 + $0x2e8] sm:$0xff]
    %v114 = vld [vmem:[%s1 + $0x2f0] sm:$0xff]
    %v115 = vld [vmem:[%s1 + $0x2f8] sm:$0xff]
    %v116 = vld [vmem:[%s1 + $0x300] sm:$0xff]
    %v117 = vld [vmem:[%s1 + $0x308] sm:$0xff]
    %v118 = vld [vmem:[%s1 + $0x310] sm:$0xff]
    %v119 = vld [vmem:[%s1 + $0x318] sm:$0xff]
    %v120 = vld [vmem:[%s1 + $0x320] sm:$0xff]
    %v121 = vld [vmem:[%s1 + $0x328] sm:$0xff]
    %v122 = vld [vmem:[%s1 + $0x330] sm:$0xff]
    %v123 = vld [vmem:[%s1 + $0x338] sm:$0xff]
    %v124 = vld [vmem:[%s1 + $0x340] sm:$0xff]
    %v125 = vld [vmem:[%s1 + $0x348] sm:$0xff]
    %v126 = vld [vmem:[%s1 + $0x350] sm:$0xff]
    %v127 = vld [vmem:[%s1 + $0x358] sm:$0xff]
    %v128 = vld [vmem:[%s1 + $0x360] sm:$0xff]
    %v129 = vld [vmem:[%s1 + $0x368] sm:$0xff]
    %v130 = vld [vmem:[%s1 + $0x370] sm:$0xff]
    %v131 = vld [vmem:[%s1 + $0x378] sm:$0xff]
    %v132 = vld [vmem:[%s1 + $0x380] sm:$0xf]
    %vm133 = vcmask 31744
    %v135 = vsel %vm133, %v19, 0
    %vm137 = vcmask 1043456
    %v139 = vsel %vm137, %v132, 0
    %141 = vmatprep.subr.mxu0 0.0
    %142 = vmatpush1.msra.mxu0 %v20
    %143 = vmatprep.subr.mxu0 0.0
    %144 = vmatpush1.msra.mxu0 %v21
    %145 = vmatprep.subr.mxu0 0.0
    %146 = vmatpush1.msra.mxu0 %v22
    %147 = vmatprep.subr.mxu0 0.0
    %148 = vmatpush1.msra.mxu0 %v23
    %149 = vmatprep.subr.mxu0 0.0
    %150 = vmatpush1.msra.mxu0 %v24
    %151 = vmatprep.subr.mxu0 0.0
    %152 = vmatpush1.msra.mxu0 %v25
    %153 = vmatprep.subr.mxu0 0.0
    %154 = vmatpush1.msra.mxu0 %v26
    %155 = vmatprep.subr.mxu0 0.0
    %156 = vmatpush1.msra.mxu0 %v27
    %157 = vmatprep.subr.mxu0 0.0
    %158 = vmatpush1.msra.mxu0 %v28
    %159 = vmatprep.subr.mxu0 0.0
    %160 = vmatpush1.msra.mxu0 %v29
    %161 = vmatprep.subr.mxu0 0.0
    %162 = vmatpush1.msra.mxu0 %v30
    %163 = vmatprep.subr.mxu0 0.0
    %164 = vmatpush1.msra.mxu0 %v31
    %165 = vmatprep.subr.mxu0 0.0
    %166 = vmatpush1.msra.mxu0 %v32
    %167 = vmatprep.subr.mxu0 0.0
    %168 = vmatpush1.msra.mxu0 %v33
    %169 = vmatprep.subr.mxu0 0.0
    %170 = vmatpush1.msra.mxu0 %v34
    %171 = vmatprep.subr.mxu0 0.0
    %172 = vmatpush1.msra.mxu0 %v35
    %173 = vmatprep.subr.mxu0 0.0
    %174 = vmatpush1.msra.mxu0 %v36
    %175 = vmatprep.subr.mxu0 0.0
    %176 = vmatpush1.msra.mxu0 %v37
    %177 = vmatprep.subr.mxu0 0.0
    %178 = vmatpush1.msra.mxu0 %v38
    %179 = vmatprep.subr.mxu0 0.0
    %180 = vmatpush1.msra.mxu0 %v39
    %181 = vmatprep.subr.mxu0 0.0
    %182 = vmatpush1.msra.mxu0 %v40
    %183 = vmatprep.subr.mxu0 0.0
    %184 = vmatpush1.msra.mxu0 %v41
    %185 = vmatprep.subr.mxu0 0.0
    %186 = vmatpush1.msra.mxu0 %v42
    %187 = vmatprep.subr.mxu0 0.0
    %188 = vmatpush1.msra.mxu0 %v43
    %189 = vmatprep.subr.mxu0 0.0
    %190 = vmatpush1.msra.mxu0 %v44
    %191 = vmatprep.subr.mxu0 0.0
    %192 = vmatpush1.msra.mxu0 %v45
    %193 = vmatprep.subr.mxu0 0.0
    %194 = vmatpush1.msra.mxu0 %v46
    %195 = vmatprep.subr.mxu0 0.0
    %196 = vmatpush1.msra.mxu0 %v47
    %197 = vmatprep.subr.mxu0 0.0
    %198 = vmatpush1.msra.mxu0 %v48
    %199 = vmatprep.subr.mxu0 0.0
    %200 = vmatpush1.msra.mxu0 %v49
    %201 = vmatprep.subr.mxu0 0.0
    %202 = vmatpush1.msra.mxu0 %v50
    %203 = vmatprep.subr.mxu0 0.0
    %204 = vmatpush1.msra.mxu0 %v51
    %205 = vmatprep.mubr.f32.mxu0 %v13
    %206 = vmatmul.mubr.f32.gmra.mrb[0].mxu0 %v12
    %v207 = vpop.f32.mrb[0].mxu0
    %v208 = vadd.f32 0.0, %v207
    %v209 = vpop.f32.mrb[0].mxu0
    %210 = vdwg.mxu0
    %211 = vmatprep.subr.mxu0 0.0
    %212 = vmatpush1.msra.mxu0 %v52
    %213 = vmatprep.subr.mxu0 0.0
    %214 = vmatpush1.msra.mxu0 %v53
    %215 = vmatprep.subr.mxu0 0.0
    %216 = vmatpush1.msra.mxu0 %v54
    %217 = vmatprep.subr.mxu0 0.0
    %218 = vmatpush1.msra.mxu0 %v55
    %219 = vmatprep.subr.mxu0 0.0
    %220 = vmatpush1.msra.mxu0 %v56
    %221 = vmatprep.subr.mxu0 0.0
    %222 = vmatpush1.msra.mxu0 %v57
    %223 = vmatprep.subr.mxu0 0.0
    %224 = vmatpush1.msra.mxu0 %v58
    %225 = vmatprep.subr.mxu0 0.0
    %226 = vmatpush1.msra.mxu0 %v59
    %227 = vmatprep.subr.mxu0 0.0
    %228 = vmatpush1.msra.mxu0 %v60
    %229 = vmatprep.subr.mxu0 0.0
    %230 = vmatpush1.msra.mxu0 %v61
    %231 = vmatprep.subr.mxu0 0.0
    %232 = vmatpush1.msra.mxu0 %v62
    %233 = vmatprep.subr.mxu0 0.0
    %234 = vmatpush1.msra.mxu0 %v63
    %235 = vmatprep.subr.mxu0 0.0
    %236 = vmatpush1.msra.mxu0 %v64
    %237 = vmatprep.subr.mxu0 0.0
    %238 = vmatpush1.msra.mxu0 %v65
    %239 = vmatprep.subr.mxu0 0.0
    %240 = vmatpush1.msra.mxu0 %v66
    %241 = vmatprep.subr.mxu0 0.0
    %242 = vmatpush1.msra.mxu0 %v67
    %243 = vmatprep.subr.mxu0 0.0
    %244 = vmatpush1.msra.mxu0 %v68
    %245 = vmatprep.subr.mxu0 0.0
    %246 = vmatpush1.msra.mxu0 %v69
    %247 = vmatprep.subr.mxu0 0.0
    %248 = vmatpush1.msra.mxu0 %v70
    %249 = vmatprep.subr.mxu0 0.0
    %250 = vmatpush1.msra.mxu0 %v71
    %251 = vmatprep.subr.mxu0 0.0
    %252 = vmatpush1.msra.mxu0 %v72
    %253 = vmatprep.subr.mxu0 0.0
    %254 = vmatpush1.msra.mxu0 %v73
    %255 = vmatprep.subr.mxu0 0.0
    %256 = vmatpush1.msra.mxu0 %v74
    %257 = vmatprep.subr.mxu0 0.0
    %258 = vmatpush1.msra.mxu0 %v75
    %259 = vmatprep.subr.mxu0 0.0
    %260 = vmatpush1.msra.mxu0 %v76
    %261 = vmatprep.subr.mxu0 0.0
    %262 = vmatpush1.msra.mxu0 %v77
    %263 = vmatprep.subr.mxu0 0.0
    %264 = vmatpush1.msra.mxu0 %v78
    %265 = vmatprep.subr.mxu0 0.0
    %266 = vmatpush1.msra.mxu0 %v79
    %267 = vmatprep.subr.mxu0 0.0
    %268 = vmatpush1.msra.mxu0 %v80
    %269 = vmatprep.subr.mxu0 0.0
    %270 = vmatpush1.msra.mxu0 %v81
    %271 = vmatprep.subr.mxu0 0.0
    %272 = vmatpush1.msra.mxu0 %v82
    %273 = vmatprep.subr.mxu0 0.0
    %274 = vmatpush1.msra.mxu0 %v83
    %275 = vmatprep.mubr.f32.mxu0 %v15
    %276 = vmatmul.mubr.f32.gmra.mrb[0].mxu0 %v14
    %v277 = vpop.f32.mrb[0].mxu0
    %v278 = vadd.f32 %v208, %v277
    %v279 = vpop.f32.mrb[0].mxu0
    %280 = vdwg.mxu0
    %281 = vmatprep.subr.mxu0 0.0
    %282 = vmatpush1.msra.mxu0 %v84
    %283 = vmatprep.subr.mxu0 0.0
    %284 = vmatpush1.msra.mxu0 %v85
    %285 = vmatprep.subr.mxu0 0.0
    %286 = vmatpush1.msra.mxu0 %v86
    %287 = vmatprep.subr.mxu0 0.0
    %288 = vmatpush1.msra.mxu0 %v87
    %289 = vmatprep.subr.mxu0 0.0
    %290 = vmatpush1.msra.mxu0 %v88
    %291 = vmatprep.subr.mxu0 0.0
    %292 = vmatpush1.msra.mxu0 %v89
    %293 = vmatprep.subr.mxu0 0.0
    %294 = vmatpush1.msra.mxu0 %v90
    %295 = vmatprep.subr.mxu0 0.0
    %296 = vmatpush1.msra.mxu0 %v91
    %297 = vmatprep.subr.mxu0 0.0
    %298 = vmatpush1.msra.mxu0 %v92
    %299 = vmatprep.subr.mxu0 0.0
    %300 = vmatpush1.msra.mxu0 %v93
    %301 = vmatprep.subr.mxu0 0.0
    %302 = vmatpush1.msra.mxu0 %v94
    %303 = vmatprep.subr.mxu0 0.0
    %304 = vmatpush1.msra.mxu0 %v95
    %305 = vmatprep.subr.mxu0 0.0
    %306 = vmatpush1.msra.mxu0 %v96
    %307 = vmatprep.subr.mxu0 0.0
    %308 = vmatpush1.msra.mxu0 %v97
    %309 = vmatprep.subr.mxu0 0.0
    %310 = vmatpush1.msra.mxu0 %v98
    %311 = vmatprep.subr.mxu0 0.0
    %312 = vmatpush1.msra.mxu0 %v99
    %313 = vmatprep.subr.mxu0 0.0
    %314 = vmatpush1.msra.mxu0 %v100
    %315 = vmatprep.subr.mxu0 0.0
    %316 = vmatpush1.msra.mxu0 %v101
    %317 = vmatprep.subr.mxu0 0.0
    %318 = vmatpush1.msra.mxu0 %v102
    %319 = vmatprep.subr.mxu0 0.0
    %320 = vmatpush1.msra.mxu0 %v103
    %321 = vmatprep.subr.mxu0 0.0
    %322 = vmatpush1.msra.mxu0 %v104
    %323 = vmatprep.subr.mxu0 0.0
    %324 = vmatpush1.msra.mxu0 %v105
    %325 = vmatprep.subr.mxu0 0.0
    %326 = vmatpush1.msra.mxu0 %v106
    %327 = vmatprep.subr.mxu0 0.0
    %328 = vmatpush1.msra.mxu0 %v107
    %329 = vmatprep.subr.mxu0 0.0
    %330 = vmatpush1.msra.mxu0 %v108
    %331 = vmatprep.subr.mxu0 0.0
    %332 = vmatpush1.msra.mxu0 %v109
    %333 = vmatprep.subr.mxu0 0.0
    %334 = vmatpush1.msra.mxu0 %v110
    %335 = vmatprep.subr.mxu0 0.0
    %336 = vmatpush1.msra.mxu0 %v111
    %337 = vmatprep.subr.mxu0 0.0
    %338 = vmatpush1.msra.mxu0 %v112
    %339 = vmatprep.subr.mxu0 0.0
    %340 = vmatpush1.msra.mxu0 %v113
    %341 = vmatprep.subr.mxu0 0.0
    %342 = vmatpush1.msra.mxu0 %v114
    %343 = vmatprep.subr.mxu0 0.0
    %344 = vmatpush1.msra.mxu0 %v115
    %345 = vmatprep.mubr.f32.mxu0 %v17
    %346 = vmatmul.mubr.f32.gmra.mrb[0].mxu0 %v16
    %v347 = vpop.f32.mrb[0].mxu0
    %v348 = vadd.f32 %v278, %v347
    %v349 = vpop.f32.mrb[0].mxu0
    %350 = vdwg.mxu0
    %351 = vmatprep.subr.mxu0 0.0
    %352 = vmatpush1.msra.mxu0 %v116
    %353 = vmatprep.subr.mxu0 0.0
    %354 = vmatpush1.msra.mxu0 %v117
    %355 = vmatprep.subr.mxu0 0.0
    %356 = vmatpush1.msra.mxu0 %v118
    %357 = vmatprep.subr.mxu0 0.0
    %358 = vmatpush1.msra.mxu0 %v119
    %359 = vmatprep.subr.mxu0 0.0
    %360 = vmatpush1.msra.mxu0 %v120
    %361 = vmatprep.subr.mxu0 0.0
    %362 = vmatpush1.msra.mxu0 %v121
    %363 = vmatprep.subr.mxu0 0.0
    %364 = vmatpush1.msra.mxu0 %v122
    %365 = vmatprep.subr.mxu0 0.0
    %366 = vmatpush1.msra.mxu0 %v123
    %367 = vmatprep.subr.mxu0 0.0
    %368 = vmatpush1.msra.mxu0 %v124
    %369 = vmatprep.subr.mxu0 0.0
    %370 = vmatpush1.msra.mxu0 %v125
    %371 = vmatprep.subr.mxu0 0.0
    %372 = vmatpush1.msra.mxu0 %v126
    %373 = vmatprep.subr.mxu0 0.0
    %374 = vmatpush1.msra.mxu0 %v127
    %375 = vmatprep.subr.mxu0 0.0
    %376 = vmatpush1.msra.mxu0 %v128
    %377 = vmatprep.subr.mxu0 0.0
    %378 = vmatpush1.msra.mxu0 %v129
    %379 = vmatprep.subr.mxu0 0.0
    %380 = vmatpush1.msra.mxu0 %v130
    %381 = vmatprep.subr.mxu0 0.0
    %382 = vmatpush1.msra.mxu0 %v131
    %383 = vmatprep.subr.mxu0 0.0
    %384 = vmatpush1.msra.mxu0 %v139
    %385 = vmatprep.subr.mxu0 0.0
    %386 = vmatpush1.msra.mxu0 0.0
    %387 = vmatprep.subr.mxu0 0.0
    %388 = vmatpush1.msra.mxu0 0.0
    %389 = vmatprep.subr.mxu0 0.0
    %390 = vmatpush1.msra.mxu0 0.0
    %391 = vmatprep.subr.mxu0 0.0
    %392 = vmatpush1.msra.mxu0 0.0
    %393 = vmatprep.subr.mxu0 0.0
    %394 = vmatpush1.msra.mxu0 0.0
    %395 = vmatprep.subr.mxu0 0.0
    %396 = vmatpush1.msra.mxu0 0.0
    %397 = vmatprep.subr.mxu0 0.0
    %398 = vmatpush1.msra.mxu0 0.0
    %399 = vmatprep.subr.mxu0 0.0
    %400 = vmatpush1.msra.mxu0 0.0
    %401 = vmatprep.subr.mxu0 0.0
    %402 = vmatpush1.msra.mxu0 0.0
    %403 = vmatprep.subr.mxu0 0.0
    %404 = vmatpush1.msra.mxu0 0.0
    %405 = vmatprep.subr.mxu0 0.0
    %406 = vmatpush1.msra.mxu0 0.0
    %407 = vmatprep.subr.mxu0 0.0
    %408 = vmatpush1.msra.mxu0 0.0
    %409 = vmatprep.subr.mxu0 0.0
    %410 = vmatpush1.msra.mxu0 0.0
    %411 = vmatprep.subr.mxu0 0.0
    %412 = vmatpush1.msra.mxu0 0.0
    %413 = vmatprep.subr.mxu0 0.0
    %414 = vmatpush1.msra.mxu0 0.0
    %415 = vmatprep.mubr.f32.mxu0 %v135
    %416 = vmatmul.mubr.f32.gmra.mrb[0].mxu0 %v18
    %v417 = vpop.f32.mrb[0].mxu0
    %v418 = vadd.f32 %v348, %v417
    %v419 = vpop.f32.mrb[0].mxu0
    %420 = vdwg.mxu0
    %vm421 = vcmask 261120
    %422 = vst.msk [vmem:[#allocation2] sm:$0xff] %vm421, %v418
    // Predicated region
    $region10: #{dct30x30_forward.1} parent=1 // pred_check
      _
    $region11: #{dct30x30_forward.1} parent=1 // pred_check_branch
      %424 = sbr.rel (0) target = $region13
    $region12: #{dct30x30_forward.1} parent=1 // pred_region
      %s426 = ssub.s32 128, 128
      %427 = vsyncadd [#allocation3], %s426
      %s429 = sshll.u32 [#allocation2], 4
      %s430 = int_to_ptr.vmem [resolvable:$true] %s429
      %432 = dma.vmem_to_hbm [thread:$0]  %s430, 128, %s2, [#allocation3]
    $region13: #{dct30x30_forward.1} parent=1 // pred_fallthru
      _
    // Predicated region
    $region14: #{dct30x30_forward.1} parent=1 // pred_check
      _
    $region15: #{dct30x30_forward.1} parent=1 // pred_check_branch
      %434 = sbr.rel (0) target = $region17
    $region16: #{dct30x30_forward.1} parent=1 // pred_region
      %435 = dma.done [#allocation3], 128
    $region17: #{dct30x30_forward.1} parent=1 // pred_fallthru
      _
    %436 = vsyncpa [#allocation3], 1

</llo_original>
